<compile_context>
chip_gen: v6e
topology: v6e:2x2x1
jax: 0.10.0
libtpu: 0.0.40
codegen_flags: <defaults>
</compile_context>

<pallas_src>
from functools import partial

import jax
import jax.numpy as jnp
from jax import lax
from jax.experimental import pallas as pl
from jax.experimental.pallas import tpu as pltpu

ACT_CHUNK = 128  # one 128-lane chunk of batch elements (one vreg row of batch)


def actor_kernel(x_ref, w1_ref, b1_ref, w2_ref, b2_ref, w3_ref, b3_ref, o_ref):
    H1 = w1_ref.shape[0]                   # 256
    H2 = w2_ref.shape[0]                   # 128
    nc = x_ref.shape[0]                    # chunks per grid step (static)

    # Hoisted once per grid step: lane-replicated fc1 weight columns and biases.
    w1 = w1_ref[...]                       # (256, 3) f32
    w1c0 = jnp.broadcast_to(w1[:, 0:1], (H1, ACT_CHUNK))
    w1c1 = jnp.broadcast_to(w1[:, 1:2], (H1, ACT_CHUNK))
    w1c2 = jnp.broadcast_to(w1[:, 2:3], (H1, ACT_CHUNK))
    b1b = jnp.broadcast_to(b1_ref[...], (H1, ACT_CHUNK))
    b2b = jnp.broadcast_to(b2_ref[...], (H2, ACT_CHUNK))
    b3b = jnp.broadcast_to(b3_ref[...], (1, ACT_CHUNK))
    w2 = w2_ref[...]                       # (128, 256) bf16, VMEM-resident
    w3 = w3_ref[...]                       # (1, 128)   bf16

    def chunk_body(c, carry):
        xT = x_ref[c]                      # (3, 128): batch on the lane axis

        # fc1 + ReLU on the VPU (K=3 contraction is wasteful on the MXU), f32.
        h1 = b1b + w1c0 * xT[0:1, :]
        h1 = h1 + w1c1 * xT[1:2, :]
        h1 = h1 + w1c2 * xT[2:3, :]
        h1 = jnp.maximum(h1, 0.0)          # (256, 128) f32

        # fc2 + ReLU: bf16 MXU operands, f32 accumulate, f32 bias/ReLU.
        h2 = jnp.dot(w2, h1.astype(jnp.bfloat16),
                     preferred_element_type=jnp.float32)
        h2 = jnp.maximum(h2 + b2b, 0.0)    # (128, 128) f32

        # fc3 + Tanh: (1,128)x(128,128) -> lane-dense (1, 128) store.
        h3 = jnp.dot(w3, h2.astype(jnp.bfloat16),
                     preferred_element_type=jnp.float32)
        o_ref[c] = jnp.tanh(h3 + b3b).astype(o_ref.dtype)
        return carry

    lax.fori_loop(0, nc, chunk_body, 0)


def _choose_tile(batch, tb):
    """Lane-multiple batch tile; force >=2 grid steps when B > 128 (v7x TCs)."""
    lanes = pl.cdiv(batch, ACT_CHUNK) * ACT_CHUNK
    tb = max(ACT_CHUNK, (tb // ACT_CHUNK) * ACT_CHUNK)
    if lanes > ACT_CHUNK:
        tb = min(tb, pl.cdiv(lanes, 2 * ACT_CHUNK) * ACT_CHUNK)
    else:
        tb = ACT_CHUNK
    return tb


@partial(jax.jit, static_argnames=("tb",))
def actor_forward(x, params, *, tb=2048):
    """x: (B, 3) float32.  Returns (B, 1) float32, matching torch Actor.forward."""
    w1, b1, w2, b2, w3, b3 = params        # torch layout: w (out, in), b (out,)
    B, d_in = x.shape
    assert d_in == 3
    H1, H2, Do = w1.shape[0], w2.shape[0], w3.shape[0]
    assert Do == 1

    tb = _choose_tile(B, tb)
    Bp = pl.cdiv(B, tb) * tb
    NB = Bp // ACT_CHUNK                   # total 128-lane chunks
    NC = tb // ACT_CHUNK                   # chunks per grid step
    grid = (NB // NC,)

    # Chunked batch-on-lane layout: (NB, 3, 128). Padded lanes are zeros; nothing
    # mixes across batch lanes, so they are sliced off at the end.
    x3 = jnp.pad(x, ((0, Bp - B), (0, 0)))
    x3 = x3.reshape(NB, ACT_CHUNK, d_in).transpose(0, 2, 1)

    # bf16 MXU operands; biases as columns for in-kernel lane replication.
    w2b = w2.astype(jnp.bfloat16)
    w3b = w3.astype(jnp.bfloat16)
    b1c = b1.reshape(H1, 1)
    b2c = b2.reshape(H2, 1)
    b3c = b3.reshape(Do, 1)

    def const(shape):
        return pl.BlockSpec(shape, lambda i: (0, 0))

    o3 = pl.pallas_call(
        actor_kernel,
        out_shape=jax.ShapeDtypeStruct((NB, Do, ACT_CHUNK), jnp.float32),
        grid_spec=pltpu.PrefetchScalarGridSpec(
            num_scalar_prefetch=0,
            grid=grid,
            in_specs=[
                pl.BlockSpec((NC, d_in, ACT_CHUNK), lambda i: (i, 0, 0)),
                const(w1.shape), const(b1c.shape),
                const(w2b.shape), const(b2c.shape),
                const(w3b.shape), const(b3c.shape),
            ],
            out_specs=pl.BlockSpec((NC, Do, ACT_CHUNK), lambda i: (i, 0, 0)),
        ),
        compiler_params=pltpu.CompilerParams(
            dimension_semantics=("parallel",),
            vmem_limit_bytes=32 * 1024 * 1024,
        ),
    )(x3, w1, b1c, w2b, b2c, w3b, b3c)

    return jnp.swapaxes(o3, 1, 2).reshape(Bp, Do)[:B]   # (B, 1)


def init_actor_params(key):
    """Deterministic init mimicking torch.nn.Linear defaults
    (U(-1/sqrt(fan_in), +1/sqrt(fan_in))). Torch layout: w (out, in), b (out,)."""
    k1, k2, k3, k4, k5, k6 = jax.random.split(key, 6)

    def linear(kw, kb, fan_in, fan_out):
        bound = 1.0 / jnp.sqrt(jnp.float32(fan_in))
        w = jax.random.uniform(kw, (fan_out, fan_in), jnp.float32, -bound, bound)
        b = jax.random.uniform(kb, (fan_out,), jnp.float32, -bound, bound)
        return w, b

    w1, b1 = linear(k1, k2, 3, 256)
    w2, b2 = linear(k3, k4, 256, 128)
    w3, b3 = linear(k5, k6, 128, 1)
    return (w1, b1, w2, b2, w3, b3)


def actor_forward_ref(x, params):
    """Plain-JAX f32 reference for correctness checking (torch-layout weights)."""
    w1, b1, w2, b2, w3, b3 = params
    h = jnp.maximum(x @ w1.T + b1, 0.0)
    h = jnp.maximum(h @ w2.T + b2, 0.0)
    return jnp.tanh(h @ w3.T + b3)


if __name__ == "__main__":
    key = jax.random.PRNGKey(0)
    kp, kx, kx2 = jax.random.split(key, 3)

    params = init_actor_params(kp)

    # Small batch of Pendulum-like states (batch=8, state_dim=3).
    x = jax.random.normal(kx, (8, 3), jnp.float32)
    out = jax.block_until_ready(actor_forward(x, params))
    ref = actor_forward_ref(x, params)
    assert out.shape == (8, 1)
    # bf16 MXU operands (f32 accumulation) -> compare against the exact-f32
    # reference with a correspondingly loosened tolerance.
    assert jnp.allclose(out, ref, atol=3e-2, rtol=3e-2), (out, ref)

    # Larger batch: exercises padding, the inner 128-lane chunk loop and a
    # multi-step "parallel" grid (B=1000 -> tb=512, grid=(2,), so both v7x
    # TensorCores get work).
    x2 = jax.random.normal(kx2, (1000, 3), jnp.float32)
    out2 = jax.block_until_ready(actor_forward(x2, params))
    ref2 = actor_forward_ref(x2, params)
    assert out2.shape == (1000, 1)
    assert jnp.allclose(out2, ref2, atol=3e-2, rtol=3e-2)

    # TODO(synk): select_action's Normal(0, 0.2) exploration noise, clip and 2x
    # scaling are host-side inference glue, not part of forward(); left out.
    print("KERNEL_OK")
</pallas_src>

<mosaic_0001>
module attributes {stable_mosaic.version = 11 : i64} {
  func.func @actor_kernel(%arg0: i32, %arg1: memref<1x3x128xf32, #tpu.memory_space<vmem>>, %arg2: memref<256x3xf32, #tpu.memory_space<vmem>>, %arg3: memref<256x1xf32, #tpu.memory_space<vmem>>, %arg4: memref<128x256xbf16, #tpu.memory_space<vmem>>, %arg5: memref<128x1xf32, #tpu.memory_space<vmem>>, %arg6: memref<1x128xbf16, #tpu.memory_space<vmem>>, %arg7: memref<1x1xf32, #tpu.memory_space<vmem>>, %arg8: memref<1x1x128xf32, #tpu.memory_space<vmem>>) attributes {dimension_semantics = [#tpu.dimension_semantics<parallel>], iteration_bounds = array<i64: 1>, scalar_prefetch = 0 : i64, scratch_operands = 0 : i64, tpu.core_type = #tpu.core_type<tc>, window_params = [{transform_indices = @transform_0, window_bounds = array<i64: 1, 3, 128>}, {pipeline_mode = #tpu.pipeline_mode<synchronous>, transform_indices = @transform_1, window_bounds = array<i64: 256, 3>}, {pipeline_mode = #tpu.pipeline_mode<synchronous>, transform_indices = @transform_2, window_bounds = array<i64: 256, 1>}, {pipeline_mode = #tpu.pipeline_mode<synchronous>, transform_indices = @transform_3, window_bounds = array<i64: 128, 256>}, {pipeline_mode = #tpu.pipeline_mode<synchronous>, transform_indices = @transform_4, window_bounds = array<i64: 128, 1>}, {pipeline_mode = #tpu.pipeline_mode<synchronous>, transform_indices = @transform_5, window_bounds = array<i64: 1, 128>}, {pipeline_mode = #tpu.pipeline_mode<synchronous>, transform_indices = @transform_6, window_bounds = array<i64: 1, 1>}, {transform_indices = @transform_7, window_bounds = array<i64: 1, 1, 128>}]} {
    %c0 = arith.constant 0 : index
    %c0_0 = arith.constant 0 : index
    %0 = vector.load %arg2[%c0, %c0_0] : memref<256x3xf32, #tpu.memory_space<vmem>>, vector<256x3xf32>
    %1 = vector.extract_strided_slice %0 {offsets = [0, 0], sizes = [256, 1], strides = [1, 1]} : vector<256x3xf32> to vector<256x1xf32>
    %2 = vector.shape_cast %1 : vector<256x1xf32> to vector<256x1xf32>
    %3 = vector.broadcast %2 : vector<256x1xf32> to vector<256x128xf32>
    %4 = vector.extract_strided_slice %0 {offsets = [0, 1], sizes = [256, 1], strides = [1, 1]} : vector<256x3xf32> to vector<256x1xf32>
    %5 = vector.shape_cast %4 : vector<256x1xf32> to vector<256x1xf32>
    %6 = vector.broadcast %5 : vector<256x1xf32> to vector<256x128xf32>
    %7 = vector.extract_strided_slice %0 {offsets = [0, 2], sizes = [256, 1], strides = [1, 1]} : vector<256x3xf32> to vector<256x1xf32>
    %8 = vector.shape_cast %7 : vector<256x1xf32> to vector<256x1xf32>
    %9 = vector.broadcast %8 : vector<256x1xf32> to vector<256x128xf32>
    %c0_1 = arith.constant 0 : index
    %c0_2 = arith.constant 0 : index
    %10 = vector.load %arg3[%c0_1, %c0_2] : memref<256x1xf32, #tpu.memory_space<vmem>>, vector<256x1xf32>
    %11 = vector.shape_cast %10 : vector<256x1xf32> to vector<256x1xf32>
    %12 = vector.broadcast %11 : vector<256x1xf32> to vector<256x128xf32>
    %c0_3 = arith.constant 0 : index
    %c0_4 = arith.constant 0 : index
    %13 = vector.load %arg5[%c0_3, %c0_4] : memref<128x1xf32, #tpu.memory_space<vmem>>, vector<128x1xf32>
    %14 = vector.shape_cast %13 : vector<128x1xf32> to vector<128x1xf32>
    %15 = vector.broadcast %14 : vector<128x1xf32> to vector<128x128xf32>
    %c0_5 = arith.constant 0 : index
    %c0_6 = arith.constant 0 : index
    %16 = vector.load %arg7[%c0_5, %c0_6] : memref<1x1xf32, #tpu.memory_space<vmem>>, vector<1x1xf32>
    %17 = vector.shape_cast %16 : vector<1x1xf32> to vector<1x1xf32>
    %18 = vector.broadcast %17 : vector<1x1xf32> to vector<1x128xf32>
    %c0_7 = arith.constant 0 : index
    %c0_8 = arith.constant 0 : index
    %19 = vector.load %arg4[%c0_7, %c0_8] : memref<128x256xbf16, #tpu.memory_space<vmem>>, vector<128x256xbf16>
    %c0_9 = arith.constant 0 : index
    %c0_10 = arith.constant 0 : index
    %20 = vector.load %arg6[%c0_9, %c0_10] : memref<1x128xbf16, #tpu.memory_space<vmem>>, vector<1x128xbf16>
    %c0_i32 = arith.constant 0 : i32
    %21 = arith.index_cast %c0_i32 : i32 to index
    %c0_11 = arith.constant 0 : index
    %c0_12 = arith.constant 0 : index
    %22 = vector.load %arg1[%21, %c0_11, %c0_12] : memref<1x3x128xf32, #tpu.memory_space<vmem>>, vector<1x3x128xf32>
    %23 = vector.shape_cast %22 : vector<1x3x128xf32> to vector<3x128xf32>
    %24 = vector.extract_strided_slice %23 {offsets = [0, 0], sizes = [1, 128], strides = [1, 1]} : vector<3x128xf32> to vector<1x128xf32>
    %25 = vector.broadcast %24 : vector<1x128xf32> to vector<256x128xf32>
    %26 = arith.mulf %3, %25 : vector<256x128xf32>
    %27 = arith.addf %12, %26 : vector<256x128xf32>
    %28 = vector.extract_strided_slice %23 {offsets = [1, 0], sizes = [1, 128], strides = [1, 1]} : vector<3x128xf32> to vector<1x128xf32>
    %29 = vector.broadcast %28 : vector<1x128xf32> to vector<256x128xf32>
    %30 = arith.mulf %6, %29 : vector<256x128xf32>
    %31 = arith.addf %27, %30 : vector<256x128xf32>
    %32 = vector.extract_strided_slice %23 {offsets = [2, 0], sizes = [1, 128], strides = [1, 1]} : vector<3x128xf32> to vector<1x128xf32>
    %33 = vector.broadcast %32 : vector<1x128xf32> to vector<256x128xf32>
    %34 = arith.mulf %9, %33 : vector<256x128xf32>
    %35 = arith.addf %31, %34 : vector<256x128xf32>
    %cst = arith.constant 0.000000e+00 : f32
    %36 = vector.broadcast %cst : f32 to vector<256x128xf32>
    %37 = arith.maximumf %35, %36 : vector<256x128xf32>
    %38 = arith.truncf %37 : vector<256x128xf32> to vector<256x128xbf16>
    %cst_13 = arith.constant dense<0.000000e+00> : vector<128x128xf32>
    %39 = tpu.matmul %19, %38, %cst_13 {dimension_numbers = #tpu.dot_dimension_numbers<[1], [0], [0], [1], [0, 0, 1, 1], [], []>} : vector<128x256xbf16>, vector<256x128xbf16>, vector<128x128xf32> -> vector<128x128xf32>
    %40 = arith.addf %39, %15 : vector<128x128xf32>
    %cst_14 = arith.constant 0.000000e+00 : f32
    %41 = vector.broadcast %cst_14 : f32 to vector<128x128xf32>
    %42 = arith.maximumf %40, %41 : vector<128x128xf32>
    %43 = arith.truncf %42 : vector<128x128xf32> to vector<128x128xbf16>
    %cst_15 = arith.constant dense<0.000000e+00> : vector<1x128xf32>
    %44 = tpu.matmul %20, %43, %cst_15 {dimension_numbers = #tpu.dot_dimension_numbers<[1], [0], [0], [1], [0, 0, 1, 1], [], []>} : vector<1x128xbf16>, vector<128x128xbf16>, vector<1x128xf32> -> vector<1x128xf32>
    %45 = arith.addf %44, %18 : vector<1x128xf32>
    %46 = math.tanh %45 : vector<1x128xf32>
    %47 = arith.index_cast %c0_i32 : i32 to index
    %c0_16 = arith.constant 0 : index
    %c0_17 = arith.constant 0 : index
    %48 = vector.load %arg8[%47, %c0_16, %c0_17] : memref<1x1x128xf32, #tpu.memory_space<vmem>>, vector<1x1x128xf32>
    %49 = vector.shape_cast %48 : vector<1x1x128xf32> to vector<1x128xf32>
    %50 = vector.shape_cast %46 : vector<1x128xf32> to vector<1x1x128xf32>
    tpu.vector_store %arg8[%47, %c0_16, %c0_17], %50 {strides = array<i32>} : memref<1x1x128xf32, #tpu.memory_space<vmem>>, vector<1x1x128xf32>,
    %c1_i32 = arith.constant 1 : i32
    return
  }
  func.func @transform_0(%arg0: i32) -> (i32, i32, i32) {
    %c0_i32 = arith.constant 0 : i32
    %c0_i32_0 = arith.constant 0 : i32
    %c0_i32_1 = arith.constant 0 : i32
    return %arg0, %c0_i32, %c0_i32_0 : i32, i32, i32
  }
  func.func @transform_1(%arg0: i32) -> (i32, i32) {
    %c0_i32 = arith.constant 0 : i32
    %c0_i32_0 = arith.constant 0 : i32
    %c0_i32_1 = arith.constant 0 : i32
    return %c0_i32, %c0_i32_0 : i32, i32
  }
  func.func @transform_2(%arg0: i32) -> (i32, i32) {
    %c0_i32 = arith.constant 0 : i32
    %c0_i32_0 = arith.constant 0 : i32
    %c0_i32_1 = arith.constant 0 : i32
    return %c0_i32, %c0_i32_0 : i32, i32
  }
  func.func @transform_3(%arg0: i32) -> (i32, i32) {
    %c0_i32 = arith.constant 0 : i32
    %c0_i32_0 = arith.constant 0 : i32
    %c0_i32_1 = arith.constant 0 : i32
    return %c0_i32, %c0_i32_0 : i32, i32
  }
  func.func @transform_4(%arg0: i32) -> (i32, i32) {
    %c0_i32 = arith.constant 0 : i32
    %c0_i32_0 = arith.constant 0 : i32
    %c0_i32_1 = arith.constant 0 : i32
    return %c0_i32, %c0_i32_0 : i32, i32
  }
  func.func @transform_5(%arg0: i32) -> (i32, i32) {
    %c0_i32 = arith.constant 0 : i32
    %c0_i32_0 = arith.constant 0 : i32
    %c0_i32_1 = arith.constant 0 : i32
    return %c0_i32, %c0_i32_0 : i32, i32
  }
  func.func @transform_6(%arg0: i32) -> (i32, i32) {
    %c0_i32 = arith.constant 0 : i32
    %c0_i32_0 = arith.constant 0 : i32
    %c0_i32_1 = arith.constant 0 : i32
    return %c0_i32, %c0_i32_0 : i32, i32
  }
  func.func @transform_7(%arg0: i32) -> (i32, i32, i32) {
    %c0_i32 = arith.constant 0 : i32
    %c0_i32_0 = arith.constant 0 : i32
    %c0_i32_1 = arith.constant 0 : i32
    return %arg0, %c0_i32, %c0_i32_0 : i32, i32, i32
  }
}

</mosaic_0001>

<llo_original>
// kernel: actor_forward.1
$region0: #{actor_forward.1}
  #allocation0 [shape = 'u32[]', space=smem, size = 0x4, offset = 0x4, fixed_abs, tag = 'smem constant byte address 0x4 - core index']
  #allocation1 [shape = 'u32[144,128]{1,0:T(1,128)}', space=vmem, size = 0x12000, scoped, tag = 'internal scratch']
  #allocation2 [shape = 'f32[1,1]{1,0:T(1,128)S(1)}', space=vmem, size = 0x200, scoped, tag = 'scoped memory for actor_forward.1']
  %s0 = inlined_call_operand.vmem [shape: f32[1,3,128], index: 0, kind: input, shape index: {}]
  %s1 = inlined_call_operand.vmem [shape: f32[256,3], index: 1, kind: input, shape index: {}]
  %s2 = inlined_call_operand.vmem [shape: f32[256,1], index: 2, kind: input, shape index: {}]
  %s3 = inlined_call_operand.vmem [shape: bf16[128,256], index: 3, kind: input, shape index: {}]
  %s4 = inlined_call_operand.vmem [shape: f32[128,1], index: 4, kind: input, shape index: {}]
  %s5 = inlined_call_operand.vmem [shape: bf16[1,128], index: 5, kind: input, shape index: {}]
  %s6 = inlined_call_operand.<no memory space> [shape: f32[1,1], index: 6, kind: input, shape index: {}]
  %s7 = inlined_call_operand.vmem [shape: f32[1,1,128], index: 7, kind: output, shape index: {}]
  %s8 = sld [smem:[#allocation0]]
  $region38: #{actor_forward.1} parent=0
    _
  %s10 = ssub.s32 1, %s8
  %s11 = scalar_select 0, %s10, %s8
  %v12 = vstv %s6
  %13 = vst [vmem:[#allocation2] sm:$0x1] %v12
  // Predicated region
  $region2: #{actor_forward.1} parent=0 // pred_check
    _
  $region3: #{actor_forward.1} parent=0 // pred_check_branch
    %15 = sbr.rel (0) target = $region5
  $region4: #{actor_forward.1} parent=0 // pred_region
    _
  $region5: #{actor_forward.1} parent=0 // pred_fallthru
    _
  // Predicated region
  $region6: #{actor_forward.1} parent=0 // pred_check
    _
  $region7: #{actor_forward.1} parent=0 // pred_check_branch
    %17 = sbr.rel (0) target = $region9
  $region8: #{actor_forward.1} parent=0 // pred_region
    _
  $region9: #{actor_forward.1} parent=0 // pred_fallthru
    _
  // Predicated region
  $region10: #{actor_forward.1} parent=0 // pred_check
    _
  $region11: #{actor_forward.1} parent=0 // pred_check_branch
    %19 = sbr.rel (0) target = $region13
  $region12: #{actor_forward.1} parent=0 // pred_region
    _
  $region13: #{actor_forward.1} parent=0 // pred_fallthru
    _
  // Predicated region
  $region14: #{actor_forward.1} parent=0 // pred_check
    _
  $region15: #{actor_forward.1} parent=0 // pred_check_branch
    %21 = sbr.rel (0) target = $region17
  $region16: #{actor_forward.1} parent=0 // pred_region
    _
  $region17: #{actor_forward.1} parent=0 // pred_fallthru
    _
  // Predicated region
  $region18: #{actor_forward.1} parent=0 // pred_check
    _
  $region19: #{actor_forward.1} parent=0 // pred_check_branch
    %23 = sbr.rel (0) target = $region21
  $region20: #{actor_forward.1} parent=0 // pred_region
    _
  $region21: #{actor_forward.1} parent=0 // pred_fallthru
    _
  // Predicated region
  $region22: #{actor_forward.1} parent=0 // pred_check
    _
  $region23: #{actor_forward.1} parent=0 // pred_check_branch
    %25 = sbr.rel (0) target = $region25
  $region24: #{actor_forward.1} parent=0 // pred_region
    _
  $region25: #{actor_forward.1} parent=0 // pred_fallthru
    _
  // Predicated region
  $region26: #{actor_forward.1} parent=0 // pred_check
    _
  $region27: #{actor_forward.1} parent=0 // pred_check_branch
    %27 = sbr.rel (0) target = $region29
  $region28: #{actor_forward.1} parent=0 // pred_region
    _
  $region29: #{actor_forward.1} parent=0 // pred_fallthru
    _
  %v29 = vld [vmem:[%s1] sm:$0xff]
  %v30 = vld [vmem:[%s1 + $0x8] sm:$0xff]
  %v31 = vld [vmem:[%s1 + $0x10] sm:$0xff]
  %v32 = vld [vmem:[%s1 + $0x18] sm:$0xff]
  %v33 = vld [vmem:[%s1 + $0x20] sm:$0xff]
  %v34 = vld [vmem:[%s1 + $0x28] sm:$0xff]
  %v35 = vld [vmem:[%s1 + $0x30] sm:$0xff]
  %v36 = vld [vmem:[%s1 + $0x38] sm:$0xff]
  %v37 = vld [vmem:[%s1 + $0x40] sm:$0xff]
  %v38 = vld [vmem:[%s1 + $0x48] sm:$0xff]
  %v39 = vld [vmem:[%s1 + $0x50] sm:$0xff]
  %v40 = vld [vmem:[%s1 + $0x58] sm:$0xff]
  %v41 = vld [vmem:[%s1 + $0x60] sm:$0xff]
  %v42 = vld [vmem:[%s1 + $0x68] sm:$0xff]
  %v43 = vld [vmem:[%s1 + $0x70] sm:$0xff]
  %v44 = vld [vmem:[%s1 + $0x78] sm:$0xff]
  %v45 = vld [vmem:[%s1 + $0x80] sm:$0xff]
  %v46 = vld [vmem:[%s1 + $0x88] sm:$0xff]
  %v47 = vld [vmem:[%s1 + $0x90] sm:$0xff]
  %v48 = vld [vmem:[%s1 + $0x98] sm:$0xff]
  %v49 = vld [vmem:[%s1 + $0xa0] sm:$0xff]
  %v50 = vld [vmem:[%s1 + $0xa8] sm:$0xff]
  %v51 = vld [vmem:[%s1 + $0xb0] sm:$0xff]
  %v52 = vld [vmem:[%s1 + $0xb8] sm:$0xff]
  %v53 = vld [vmem:[%s1 + $0xc0] sm:$0xff]
  %v54 = vld [vmem:[%s1 + $0xc8] sm:$0xff]
  %v55 = vld [vmem:[%s1 + $0xd0] sm:$0xff]
  %v56 = vld [vmem:[%s1 + $0xd8] sm:$0xff]
  %v57 = vld [vmem:[%s1 + $0xe0] sm:$0xff]
  %v58 = vld [vmem:[%s1 + $0xe8] sm:$0xff]
  %v59 = vld [vmem:[%s1 + $0xf0] sm:$0xff]
  %v60 = vld [vmem:[%s1 + $0xf8] sm:$0xff]
  %62 = vset.pattern.permute.xlu0 0
  %63 = vperm.xlu0 %62, %v29
  %v64 = vpop.permute.xlu0 %63
  %67 = vset.pattern.permute.xlu0 0
  %68 = vperm.xlu0 %67, %v30
  %v69 = vpop.permute.xlu0 %68
  %72 = vset.pattern.permute.xlu0 0
  %73 = vperm.xlu0 %72, %v31
  %v74 = vpop.permute.xlu0 %73
  %77 = vset.pattern.permute.xlu0 0
  %78 = vperm.xlu0 %77, %v32
  %v79 = vpop.permute.xlu0 %78
  %82 = vset.pattern.permute.xlu0 0
  %83 = vperm.xlu0 %82, %v33
  %v84 = vpop.permute.xlu0 %83
  %87 = vset.pattern.permute.xlu0 0
  %88 = vperm.xlu0 %87, %v34
  %v89 = vpop.permute.xlu0 %88
  %92 = vset.pattern.permute.xlu0 0
  %93 = vperm.xlu0 %92, %v35
  %v94 = vpop.permute.xlu0 %93
  %97 = vset.pattern.permute.xlu0 0
  %98 = vperm.xlu0 %97, %v36
  %v99 = vpop.permute.xlu0 %98
  %102 = vset.pattern.permute.xlu0 0
  %103 = vperm.xlu0 %102, %v37
  %v104 = vpop.permute.xlu0 %103
  %107 = vset.pattern.permute.xlu0 0
  %108 = vperm.xlu0 %107, %v38
  %v109 = vpop.permute.xlu0 %108
  %112 = vset.pattern.permute.xlu0 0
  %113 = vperm.xlu0 %112, %v39
  %v114 = vpop.permute.xlu0 %113
  %117 = vset.pattern.permute.xlu0 0
  %118 = vperm.xlu0 %117, %v40
  %v119 = vpop.permute.xlu0 %118
  %122 = vset.pattern.permute.xlu0 0
  %123 = vperm.xlu0 %122, %v41
  %v124 = vpop.permute.xlu0 %123
  %127 = vset.pattern.permute.xlu0 0
  %128 = vperm.xlu0 %127, %v42
  %v129 = vpop.permute.xlu0 %128
  %132 = vset.pattern.permute.xlu0 0
  %133 = vperm.xlu0 %132, %v43
  %v134 = vpop.permute.xlu0 %133
  %137 = vset.pattern.permute.xlu0 0
  %138 = vperm.xlu0 %137, %v44
  %v139 = vpop.permute.xlu0 %138
  %142 = vset.pattern.permute.xlu0 0
  %143 = vperm.xlu0 %142, %v45
  %v144 = vpop.permute.xlu0 %143
  %147 = vset.pattern.permute.xlu0 0
  %148 = vperm.xlu0 %147, %v46
  %v149 = vpop.permute.xlu0 %148
  %152 = vset.pattern.permute.xlu0 0
  %153 = vperm.xlu0 %152, %v47
  %v154 = vpop.permute.xlu0 %153
  %157 = vset.pattern.permute.xlu0 0
  %158 = vperm.xlu0 %157, %v48
  %v159 = vpop.permute.xlu0 %158
  %162 = vset.pattern.permute.xlu0 0
  %163 = vperm.xlu0 %162, %v49
  %v164 = vpop.permute.xlu0 %163
  %167 = vset.pattern.permute.xlu0 0
  %168 = vperm.xlu0 %167, %v50
  %v169 = vpop.permute.xlu0 %168
  %172 = vset.pattern.permute.xlu0 0
  %173 = vperm.xlu0 %172, %v51
  %v174 = vpop.permute.xlu0 %173
  %177 = vset.pattern.permute.xlu0 0
  %178 = vperm.xlu0 %177, %v52
  %v179 = vpop.permute.xlu0 %178
  %182 = vset.pattern.permute.xlu0 0
  %183 = vperm.xlu0 %182, %v53
  %v184 = vpop.permute.xlu0 %183
  %187 = vset.pattern.permute.xlu0 0
  %188 = vperm.xlu0 %187, %v54
  %v189 = vpop.permute.xlu0 %188
  %192 = vset.pattern.permute.xlu0 0
  %193 = vperm.xlu0 %192, %v55
  %v194 = vpop.permute.xlu0 %193
  %197 = vset.pattern.permute.xlu0 0
  %198 = vperm.xlu0 %197, %v56
  %v199 = vpop.permute.xlu0 %198
  %202 = vset.pattern.permute.xlu0 0
  %203 = vperm.xlu0 %202, %v57
  %v204 = vpop.permute.xlu0 %203
  %207 = vset.pattern.permute.xlu0 0
  %208 = vperm.xlu0 %207, %v58
  %v209 = vpop.permute.xlu0 %208
  %212 = vset.pattern.permute.xlu0 0
  %213 = vperm.xlu0 %212, %v59
  %v214 = vpop.permute.xlu0 %213
  %217 = vset.pattern.permute.xlu0 0
  %218 = vperm.xlu0 %217, %v60
  %v219 = vpop.permute.xlu0 %218
  %221 = vset.pattern.permute.xlu0 1
  %222 = vperm.xlu0 %221, %v29
  %v223 = vpop.permute.xlu0 %222
  %225 = vset.pattern.permute.xlu0 1
  %226 = vperm.xlu0 %225, %v30
  %v227 = vpop.permute.xlu0 %226
  %229 = vset.pattern.permute.xlu0 1
  %230 = vperm.xlu0 %229, %v31
  %v231 = vpop.permute.xlu0 %230
  %233 = vset.pattern.permute.xlu0 1
  %234 = vperm.xlu0 %233, %v32
  %v235 = vpop.permute.xlu0 %234
  %237 = vset.pattern.permute.xlu0 1
  %238 = vperm.xlu0 %237, %v33
  %v239 = vpop.permute.xlu0 %238
  %241 = vset.pattern.permute.xlu0 1
  %242 = vperm.xlu0 %241, %v34
  %v243 = vpop.permute.xlu0 %242
  %245 = vset.pattern.permute.xlu0 1
  %246 = vperm.xlu0 %245, %v35
  %v247 = vpop.permute.xlu0 %246
  %249 = vset.pattern.permute.xlu0 1
  %250 = vperm.xlu0 %249, %v36
  %v251 = vpop.permute.xlu0 %250
  %253 = vset.pattern.permute.xlu0 1
  %254 = vperm.xlu0 %253, %v37
  %v255 = vpop.permute.xlu0 %254
  %257 = vset.pattern.permute.xlu0 1
  %258 = vperm.xlu0 %257, %v38
  %v259 = vpop.permute.xlu0 %258
  %261 = vset.pattern.permute.xlu0 1
  %262 = vperm.xlu0 %261, %v39
  %v263 = vpop.permute.xlu0 %262
  %265 = vset.pattern.permute.xlu0 1
  %266 = vperm.xlu0 %265, %v40
  %v267 = vpop.permute.xlu0 %266
  %269 = vset.pattern.permute.xlu0 1
  %270 = vperm.xlu0 %269, %v41
  %v271 = vpop.permute.xlu0 %270
  %273 = vset.pattern.permute.xlu0 1
  %274 = vperm.xlu0 %273, %v42
  %v275 = vpop.permute.xlu0 %274
  %277 = vset.pattern.permute.xlu0 1
  %278 = vperm.xlu0 %277, %v43
  %v279 = vpop.permute.xlu0 %278
  %281 = vset.pattern.permute.xlu0 1
  %282 = vperm.xlu0 %281, %v44
  %v283 = vpop.permute.xlu0 %282
  %285 = vset.pattern.permute.xlu0 1
  %286 = vperm.xlu0 %285, %v45
  %v287 = vpop.permute.xlu0 %286
  %289 = vset.pattern.permute.xlu0 1
  %290 = vperm.xlu0 %289, %v46
  %v291 = vpop.permute.xlu0 %290
  %293 = vset.pattern.permute.xlu0 1
  %294 = vperm.xlu0 %293, %v47
  %v295 = vpop.permute.xlu0 %294
  %297 = vset.pattern.permute.xlu0 1
  %298 = vperm.xlu0 %297, %v48
  %v299 = vpop.permute.xlu0 %298
  %301 = vset.pattern.permute.xlu0 1
  %302 = vperm.xlu0 %301, %v49
  %v303 = vpop.permute.xlu0 %302
  %305 = vset.pattern.permute.xlu0 1
  %306 = vperm.xlu0 %305, %v50
  %v307 = vpop.permute.xlu0 %306
  %309 = vset.pattern.permute.xlu0 1
  %310 = vperm.xlu0 %309, %v51
  %v311 = vpop.permute.xlu0 %310
  %313 = vset.pattern.permute.xlu0 1
  %314 = vperm.xlu0 %313, %v52
  %v315 = vpop.permute.xlu0 %314
  %317 = vset.pattern.permute.xlu0 1
  %318 = vperm.xlu0 %317, %v53
  %v319 = vpop.permute.xlu0 %318
  %321 = vset.pattern.permute.xlu0 1
  %322 = vperm.xlu0 %321, %v54
  %v323 = vpop.permute.xlu0 %322
  %325 = vset.pattern.permute.xlu0 1
  %326 = vperm.xlu0 %325, %v55
  %v327 = vpop.permute.xlu0 %326
  %329 = vset.pattern.permute.xlu0 1
  %330 = vperm.xlu0 %329, %v56
  %v331 = vpop.permute.xlu0 %330
  %333 = vset.pattern.permute.xlu0 1
  %334 = vperm.xlu0 %333, %v57
  %v335 = vpop.permute.xlu0 %334
  %337 = vset.pattern.permute.xlu0 1
  %338 = vperm.xlu0 %337, %v58
  %v339 = vpop.permute.xlu0 %338
  %341 = vset.pattern.permute.xlu0 1
  %342 = vperm.xlu0 %341, %v59
  %v343 = vpop.permute.xlu0 %342
  %345 = vset.pattern.permute.xlu0 1
  %346 = vperm.xlu0 %345, %v60
  %v347 = vpop.permute.xlu0 %346
  %349 = vset.pattern.permute.xlu0 2
  %350 = vperm.xlu0 %349, %v29
  %v351 = vpop.permute.xlu0 %350
  %353 = vset.pattern.permute.xlu0 2
  %354 = vperm.xlu0 %353, %v30
  %v355 = vpop.permute.xlu0 %354
  %357 = vset.pattern.permute.xlu0 2
  %358 = vperm.xlu0 %357, %v31
  %v359 = vpop.permute.xlu0 %358
  %361 = vset.pattern.permute.xlu0 2
  %362 = vperm.xlu0 %361, %v32
  %v363 = vpop.permute.xlu0 %362
  %365 = vset.pattern.permute.xlu0 2
  %366 = vperm.xlu0 %365, %v33
  %v367 = vpop.permute.xlu0 %366
  %369 = vset.pattern.permute.xlu0 2
  %370 = vperm.xlu0 %369, %v34
  %v371 = vpop.permute.xlu0 %370
  %373 = vset.pattern.permute.xlu0 2
  %374 = vperm.xlu0 %373, %v35
  %v375 = vpop.permute.xlu0 %374
  %377 = vset.pattern.permute.xlu0 2
  %378 = vperm.xlu0 %377, %v36
  %v379 = vpop.permute.xlu0 %378
  %381 = vset.pattern.permute.xlu0 2
  %382 = vperm.xlu0 %381, %v37
  %v383 = vpop.permute.xlu0 %382
  %385 = vset.pattern.permute.xlu0 2
  %386 = vperm.xlu0 %385, %v38
  %v387 = vpop.permute.xlu0 %386
  %389 = vset.pattern.permute.xlu0 2
  %390 = vperm.xlu0 %389, %v39
  %v391 = vpop.permute.xlu0 %390
  %393 = vset.pattern.permute.xlu0 2
  %394 = vperm.xlu0 %393, %v40
  %v395 = vpop.permute.xlu0 %394
  %397 = vset.pattern.permute.xlu0 2
  %398 = vperm.xlu0 %397, %v41
  %v399 = vpop.permute.xlu0 %398
  %401 = vset.pattern.permute.xlu0 2
  %402 = vperm.xlu0 %401, %v42
  %v403 = vpop.permute.xlu0 %402
  %405 = vset.pattern.permute.xlu0 2
  %406 = vperm.xlu0 %405, %v43
  %v407 = vpop.permute.xlu0 %406
  %409 = vset.pattern.permute.xlu0 2
  %410 = vperm.xlu0 %409, %v44
  %v411 = vpop.permute.xlu0 %410
  %413 = vset.pattern.permute.xlu0 2
  %414 = vperm.xlu0 %413, %v45
  %v415 = vpop.permute.xlu0 %414
  %417 = vset.pattern.permute.xlu0 2
  %418 = vperm.xlu0 %417, %v46
  %v419 = vpop.permute.xlu0 %418
  %421 = vset.pattern.permute.xlu0 2
  %422 = vperm.xlu0 %421, %v47
  %v423 = vpop.permute.xlu0 %422
  %425 = vset.pattern.permute.xlu0 2
  %426 = vperm.xlu0 %425, %v48
  %v427 = vpop.permute.xlu0 %426
  %429 = vset.pattern.permute.xlu0 2
  %430 = vperm.xlu0 %429, %v49
  %v431 = vpop.permute.xlu0 %430
  %433 = vset.pattern.permute.xlu0 2
  %434 = vperm.xlu0 %433, %v50
  %v435 = vpop.permute.xlu0 %434
  %437 = vset.pattern.permute.xlu0 2
  %438 = vperm.xlu0 %437, %v51
  %v439 = vpop.permute.xlu0 %438
  %441 = vset.pattern.permute.xlu0 2
  %442 = vperm.xlu0 %441, %v52
  %v443 = vpop.permute.xlu0 %442
  %445 = vset.pattern.permute.xlu0 2
  %446 = vperm.xlu0 %445, %v53
  %v447 = vpop.permute.xlu0 %446
  %449 = vset.pattern.permute.xlu0 2
  %450 = vperm.xlu0 %449, %v54
  %v451 = vpop.permute.xlu0 %450
  %453 = vset.pattern.permute.xlu0 2
  %454 = vperm.xlu0 %453, %v55
  %v455 = vpop.permute.xlu0 %454
  %457 = vset.pattern.permute.xlu0 2
  %458 = vperm.xlu0 %457, %v56
  %v459 = vpop.permute.xlu0 %458
  %461 = vset.pattern.permute.xlu0 2
  %462 = vperm.xlu0 %461, %v57
  %v463 = vpop.permute.xlu0 %462
  %465 = vset.pattern.permute.xlu0 2
  %466 = vperm.xlu0 %465, %v58
  %v467 = vpop.permute.xlu0 %466
  %469 = vset.pattern.permute.xlu0 2
  %470 = vperm.xlu0 %469, %v59
  %v471 = vpop.permute.xlu0 %470
  %473 = vset.pattern.permute.xlu0 2
  %474 = vperm.xlu0 %473, %v60
  %v475 = vpop.permute.xlu0 %474
  %v477 = vld [vmem:[%s2] sm:$0xff]
  %v478 = vld [vmem:[%s2 + $0x8] sm:$0xff]
  %v479 = vld [vmem:[%s2 + $0x10] sm:$0xff]
  %v480 = vld [vmem:[%s2 + $0x18] sm:$0xff]
  %v481 = vld [vmem:[%s2 + $0x20] sm:$0xff]
  %v482 = vld [vmem:[%s2 + $0x28] sm:$0xff]
  %v483 = vld [vmem:[%s2 + $0x30] sm:$0xff]
  %v484 = vld [vmem:[%s2 + $0x38] sm:$0xff]
  %v485 = vld [vmem:[%s2 + $0x40] sm:$0xff]
  %v486 = vld [vmem:[%s2 + $0x48] sm:$0xff]
  %v487 = vld [vmem:[%s2 + $0x50] sm:$0xff]
  %v488 = vld [vmem:[%s2 + $0x58] sm:$0xff]
  %v489 = vld [vmem:[%s2 + $0x60] sm:$0xff]
  %v490 = vld [vmem:[%s2 + $0x68] sm:$0xff]
  %v491 = vld [vmem:[%s2 + $0x70] sm:$0xff]
  %v492 = vld [vmem:[%s2 + $0x78] sm:$0xff]
  %v493 = vld [vmem:[%s2 + $0x80] sm:$0xff]
  %v494 = vld [vmem:[%s2 + $0x88] sm:$0xff]
  %v495 = vld [vmem:[%s2 + $0x90] sm:$0xff]
  %v496 = vld [vmem:[%s2 + $0x98] sm:$0xff]
  %v497 = vld [vmem:[%s2 + $0xa0] sm:$0xff]
  %v498 = vld [vmem:[%s2 + $0xa8] sm:$0xff]
  %v499 = vld [vmem:[%s2 + $0xb0] sm:$0xff]
  %v500 = vld [vmem:[%s2 + $0xb8] sm:$0xff]
  %v501 = vld [vmem:[%s2 + $0xc0] sm:$0xff]
  %v502 = vld [vmem:[%s2 + $0xc8] sm:$0xff]
  %v503 = vld [vmem:[%s2 + $0xd0] sm:$0xff]
  %v504 = vld [vmem:[%s2 + $0xd8] sm:$0xff]
  %v505 = vld [vmem:[%s2 + $0xe0] sm:$0xff]
  %v506 = vld [vmem:[%s2 + $0xe8] sm:$0xff]
  %v507 = vld [vmem:[%s2 + $0xf0] sm:$0xff]
  %v508 = vld [vmem:[%s2 + $0xf8] sm:$0xff]
  %510 = vset.pattern.permute.xlu0 0
  %511 = vperm.xlu0 %510, %v477
  %v512 = vpop.permute.xlu0 %511
  %515 = vset.pattern.permute.xlu0 0
  %516 = vperm.xlu0 %515, %v478
  %v517 = vpop.permute.xlu0 %516
  %520 = vset.pattern.permute.xlu0 0
  %521 = vperm.xlu0 %520, %v479
  %v522 = vpop.permute.xlu0 %521
  %525 = vset.pattern.permute.xlu0 0
  %526 = vperm.xlu0 %525, %v480
  %v527 = vpop.permute.xlu0 %526
  %530 = vset.pattern.permute.xlu0 0
  %531 = vperm.xlu0 %530, %v481
  %v532 = vpop.permute.xlu0 %531
  %535 = vset.pattern.permute.xlu0 0
  %536 = vperm.xlu0 %535, %v482
  %v537 = vpop.permute.xlu0 %536
  %540 = vset.pattern.permute.xlu0 0
  %541 = vperm.xlu0 %540, %v483
  %v542 = vpop.permute.xlu0 %541
  %545 = vset.pattern.permute.xlu0 0
  %546 = vperm.xlu0 %545, %v484
  %v547 = vpop.permute.xlu0 %546
  %550 = vset.pattern.permute.xlu0 0
  %551 = vperm.xlu0 %550, %v485
  %v552 = vpop.permute.xlu0 %551
  %555 = vset.pattern.permute.xlu0 0
  %556 = vperm.xlu0 %555, %v486
  %v557 = vpop.permute.xlu0 %556
  %560 = vset.pattern.permute.xlu0 0
  %561 = vperm.xlu0 %560, %v487
  %v562 = vpop.permute.xlu0 %561
  %565 = vset.pattern.permute.xlu0 0
  %566 = vperm.xlu0 %565, %v488
  %v567 = vpop.permute.xlu0 %566
  %570 = vset.pattern.permute.xlu0 0
  %571 = vperm.xlu0 %570, %v489
  %v572 = vpop.permute.xlu0 %571
  %575 = vset.pattern.permute.xlu0 0
  %576 = vperm.xlu0 %575, %v490
  %v577 = vpop.permute.xlu0 %576
  %580 = vset.pattern.permute.xlu0 0
  %581 = vperm.xlu0 %580, %v491
  %v582 = vpop.permute.xlu0 %581
  %585 = vset.pattern.permute.xlu0 0
  %586 = vperm.xlu0 %585, %v492
  %v587 = vpop.permute.xlu0 %586
  %590 = vset.pattern.permute.xlu0 0
  %591 = vperm.xlu0 %590, %v493
  %v592 = vpop.permute.xlu0 %591
  %595 = vset.pattern.permute.xlu0 0
  %596 = vperm.xlu0 %595, %v494
  %v597 = vpop.permute.xlu0 %596
  %600 = vset.pattern.permute.xlu0 0
  %601 = vperm.xlu0 %600, %v495
  %v602 = vpop.permute.xlu0 %601
  %605 = vset.pattern.permute.xlu0 0
  %606 = vperm.xlu0 %605, %v496
  %v607 = vpop.permute.xlu0 %606
  %610 = vset.pattern.permute.xlu0 0
  %611 = vperm.xlu0 %610, %v497
  %v612 = vpop.permute.xlu0 %611
  %615 = vset.pattern.permute.xlu0 0
  %616 = vperm.xlu0 %615, %v498
  %v617 = vpop.permute.xlu0 %616
  %620 = vset.pattern.permute.xlu0 0
  %621 = vperm.xlu0 %620, %v499
  %v622 = vpop.permute.xlu0 %621
  %625 = vset.pattern.permute.xlu0 0
  %626 = vperm.xlu0 %625, %v500
  %v627 = vpop.permute.xlu0 %626
  %630 = vset.pattern.permute.xlu0 0
  %631 = vperm.xlu0 %630, %v501
  %v632 = vpop.permute.xlu0 %631
  %635 = vset.pattern.permute.xlu0 0
  %636 = vperm.xlu0 %635, %v502
  %v637 = vpop.permute.xlu0 %636
  %640 = vset.pattern.permute.xlu0 0
  %641 = vperm.xlu0 %640, %v503
  %v642 = vpop.permute.xlu0 %641
  %645 = vset.pattern.permute.xlu0 0
  %646 = vperm.xlu0 %645, %v504
  %v647 = vpop.permute.xlu0 %646
  %650 = vset.pattern.permute.xlu0 0
  %651 = vperm.xlu0 %650, %v505
  %v652 = vpop.permute.xlu0 %651
  %655 = vset.pattern.permute.xlu0 0
  %656 = vperm.xlu0 %655, %v506
  %v657 = vpop.permute.xlu0 %656
  %660 = vset.pattern.permute.xlu0 0
  %661 = vperm.xlu0 %660, %v507
  %v662 = vpop.permute.xlu0 %661
  %665 = vset.pattern.permute.xlu0 0
  %666 = vperm.xlu0 %665, %v508
  %v667 = vpop.permute.xlu0 %666
  %v669 = vld [vmem:[%s4] sm:$0xff]
  %v670 = vld [vmem:[%s4 + $0x8] sm:$0xff]
  %v671 = vld [vmem:[%s4 + $0x10] sm:$0xff]
  %v672 = vld [vmem:[%s4 + $0x18] sm:$0xff]
  %v673 = vld [vmem:[%s4 + $0x20] sm:$0xff]
  %v674 = vld [vmem:[%s4 + $0x28] sm:$0xff]
  %v675 = vld [vmem:[%s4 + $0x30] sm:$0xff]
  %v676 = vld [vmem:[%s4 + $0x38] sm:$0xff]
  %v677 = vld [vmem:[%s4 + $0x40] sm:$0xff]
  %v678 = vld [vmem:[%s4 + $0x48] sm:$0xff]
  %v679 = vld [vmem:[%s4 + $0x50] sm:$0xff]
  %v680 = vld [vmem:[%s4 + $0x58] sm:$0xff]
  %v681 = vld [vmem:[%s4 + $0x60] sm:$0xff]
  %v682 = vld [vmem:[%s4 + $0x68] sm:$0xff]
  %v683 = vld [vmem:[%s4 + $0x70] sm:$0xff]
  %v684 = vld [vmem:[%s4 + $0x78] sm:$0xff]
  %686 = vset.pattern.permute.xlu0 0
  %687 = vperm.xlu0 %686, %v669
  %v688 = vpop.permute.xlu0 %687
  %691 = vset.pattern.permute.xlu0 0
  %692 = vperm.xlu0 %691, %v670
  %v693 = vpop.permute.xlu0 %692
  %696 = vset.pattern.permute.xlu0 0
  %697 = vperm.xlu0 %696, %v671
  %v698 = vpop.permute.xlu0 %697
  %701 = vset.pattern.permute.xlu0 0
  %702 = vperm.xlu0 %701, %v672
  %v703 = vpop.permute.xlu0 %702
  %706 = vset.pattern.permute.xlu0 0
  %707 = vperm.xlu0 %706, %v673
  %v708 = vpop.permute.xlu0 %707
  %711 = vset.pattern.permute.xlu0 0
  %712 = vperm.xlu0 %711, %v674
  %v713 = vpop.permute.xlu0 %712
  %716 = vset.pattern.permute.xlu0 0
  %717 = vperm.xlu0 %716, %v675
  %v718 = vpop.permute.xlu0 %717
  %721 = vset.pattern.permute.xlu0 0
  %722 = vperm.xlu0 %721, %v676
  %v723 = vpop.permute.xlu0 %722
  %726 = vset.pattern.permute.xlu0 0
  %727 = vperm.xlu0 %726, %v677
  %v728 = vpop.permute.xlu0 %727
  %731 = vset.pattern.permute.xlu0 0
  %732 = vperm.xlu0 %731, %v678
  %v733 = vpop.permute.xlu0 %732
  %736 = vset.pattern.permute.xlu0 0
  %737 = vperm.xlu0 %736, %v679
  %v738 = vpop.permute.xlu0 %737
  %741 = vset.pattern.permute.xlu0 0
  %742 = vperm.xlu0 %741, %v680
  %v743 = vpop.permute.xlu0 %742
  %746 = vset.pattern.permute.xlu0 0
  %747 = vperm.xlu0 %746, %v681
  %v748 = vpop.permute.xlu0 %747
  %751 = vset.pattern.permute.xlu0 0
  %752 = vperm.xlu0 %751, %v682
  %v753 = vpop.permute.xlu0 %752
  %756 = vset.pattern.permute.xlu0 0
  %757 = vperm.xlu0 %756, %v683
  %v758 = vpop.permute.xlu0 %757
  %761 = vset.pattern.permute.xlu0 0
  %762 = vperm.xlu0 %761, %v684
  %v763 = vpop.permute.xlu0 %762
  %v765 = vld [vmem:[#allocation2] sm:$0x1]
  %767 = vset.pattern.permute.xlu0 0
  %768 = vperm.xlu0 %767, %v765
  %v769 = vpop.permute.xlu0 %768
  %v771 = vlaneseq
  %v772 = vshrl.u32 %v771, 7
  %v773 = vsub.s32 0, %v772
  %v774 = vrot.slane %v769, %v773
  %v775 = vld [vmem:[%s3] sm:$0xff]
  %v776 = vld [vmem:[%s3 + $0x8] sm:$0xff]
  %v777 = vld [vmem:[%s3 + $0x10] sm:$0xff]
  %v778 = vld [vmem:[%s3 + $0x18] sm:$0xff]
  %v779 = vld [vmem:[%s3 + $0x20] sm:$0xff]
  %v780 = vld [vmem:[%s3 + $0x28] sm:$0xff]
  %v781 = vld [vmem:[%s3 + $0x30] sm:$0xff]
  %v782 = vld [vmem:[%s3 + $0x38] sm:$0xff]
  %v783 = vld [vmem:[%s3 + $0x40] sm:$0xff]
  %v784 = vld [vmem:[%s3 + $0x48] sm:$0xff]
  %v785 = vld [vmem:[%s3 + $0x50] sm:$0xff]
  %v786 = vld [vmem:[%s3 + $0x58] sm:$0xff]
  %v787 = vld [vmem:[%s3 + $0x60] sm:$0xff]
  %v788 = vld [vmem:[%s3 + $0x68] sm:$0xff]
  %v789 = vld [vmem:[%s3 + $0x70] sm:$0xff]
  %v790 = vld [vmem:[%s3 + $0x78] sm:$0xff]
  %v791 = vld [vmem:[%s5] sm:$0x1]
  %v792 = vld [vmem:[%s0] sm:$0x7]
  %v793 = vlaneseq
  %v794 = vshrl.u32 %v793, 7
  %v795 = vsub.s32 0, %v794
  %v796 = vrot.slane %v792, %v795
  %v797 = vmul.f32 %v64, %v796
  %v798 = vmul.f32 %v69, %v796
  %v799 = vmul.f32 %v74, %v796
  %v800 = vmul.f32 %v79, %v796
  %v801 = vmul.f32 %v84, %v796
  %v802 = vmul.f32 %v89, %v796
  %v803 = vmul.f32 %v94, %v796
  %v804 = vmul.f32 %v99, %v796
  %v805 = vmul.f32 %v104, %v796
  %v806 = vmul.f32 %v109, %v796
  %v807 = vmul.f32 %v114, %v796
  %v808 = vmul.f32 %v119, %v796
  %v809 = vmul.f32 %v124, %v796
  %v810 = vmul.f32 %v129, %v796
  %v811 = vmul.f32 %v134, %v796
  %v812 = vmul.f32 %v139, %v796
  %v813 = vmul.f32 %v144, %v796
  %v814 = vmul.f32 %v149, %v796
  %v815 = vmul.f32 %v154, %v796
  %v816 = vmul.f32 %v159, %v796
  %v817 = vmul.f32 %v164, %v796
  %v818 = vmul.f32 %v169, %v796
  %v819 = vmul.f32 %v174, %v796
  %v820 = vmul.f32 %v179, %v796
  %v821 = vmul.f32 %v184, %v796
  %v822 = vmul.f32 %v189, %v796
  %v823 = vmul.f32 %v194, %v796
  %v824 = vmul.f32 %v199, %v796
  %v825 = vmul.f32 %v204, %v796
  %v826 = vmul.f32 %v209, %v796
  %v827 = vmul.f32 %v214, %v796
  %v828 = vmul.f32 %v219, %v796
  %v829 = vadd.f32 %v512, %v797
  %v830 = vadd.f32 %v517, %v798
  %v831 = vadd.f32 %v522, %v799
  %v832 = vadd.f32 %v527, %v800
  %v833 = vadd.f32 %v532, %v801
  %v834 = vadd.f32 %v537, %v802
  %v835 = vadd.f32 %v542, %v803
  %v836 = vadd.f32 %v547, %v804
  %v837 = vadd.f32 %v552, %v805
  %v838 = vadd.f32 %v557, %v806
  %v839 = vadd.f32 %v562, %v807
  %v840 = vadd.f32 %v567, %v808
  %v841 = vadd.f32 %v572, %v809
  %v842 = vadd.f32 %v577, %v810
  %v843 = vadd.f32 %v582, %v811
  %v844 = vadd.f32 %v587, %v812
  %v845 = vadd.f32 %v592, %v813
  %v846 = vadd.f32 %v597, %v814
  %v847 = vadd.f32 %v602, %v815
  %v848 = vadd.f32 %v607, %v816
  %v849 = vadd.f32 %v612, %v817
  %v850 = vadd.f32 %v617, %v818
  %v851 = vadd.f32 %v622, %v819
  %v852 = vadd.f32 %v627, %v820
  %v853 = vadd.f32 %v632, %v821
  %v854 = vadd.f32 %v637, %v822
  %v855 = vadd.f32 %v642, %v823
  %v856 = vadd.f32 %v647, %v824
  %v857 = vadd.f32 %v652, %v825
  %v858 = vadd.f32 %v657, %v826
  %v859 = vadd.f32 %v662, %v827
  %v860 = vadd.f32 %v667, %v828
  %v861 = vlaneseq
  %v862 = vshrl.u32 %v861, 7
  %v863 = vsub.s32 1, %v862
  %v864 = vrot.slane %v792, %v863
  %v865 = vmul.f32 %v223, %v864
  %v866 = vmul.f32 %v227, %v864
  %v867 = vmul.f32 %v231, %v864
  %v868 = vmul.f32 %v235, %v864
  %v869 = vmul.f32 %v239, %v864
  %v870 = vmul.f32 %v243, %v864
  %v871 = vmul.f32 %v247, %v864
  %v872 = vmul.f32 %v251, %v864
  %v873 = vmul.f32 %v255, %v864
  %v874 = vmul.f32 %v259, %v864
  %v875 = vmul.f32 %v263, %v864
  %v876 = vmul.f32 %v267, %v864
  %v877 = vmul.f32 %v271, %v864
  %v878 = vmul.f32 %v275, %v864
  %v879 = vmul.f32 %v279, %v864
  %v880 = vmul.f32 %v283, %v864
  %v881 = vmul.f32 %v287, %v864
  %v882 = vmul.f32 %v291, %v864
  %v883 = vmul.f32 %v295, %v864
  %v884 = vmul.f32 %v299, %v864
  %v885 = vmul.f32 %v303, %v864
  %v886 = vmul.f32 %v307, %v864
  %v887 = vmul.f32 %v311, %v864
  %v888 = vmul.f32 %v315, %v864
  %v889 = vmul.f32 %v319, %v864
  %v890 = vmul.f32 %v323, %v864
  %v891 = vmul.f32 %v327, %v864
  %v892 = vmul.f32 %v331, %v864
  %v893 = vmul.f32 %v335, %v864
  %v894 = vmul.f32 %v339, %v864
  %v895 = vmul.f32 %v343, %v864
  %v896 = vmul.f32 %v347, %v864
  %v897 = vadd.f32 %v829, %v865
  %v898 = vadd.f32 %v830, %v866
  %v899 = vadd.f32 %v831, %v867
  %v900 = vadd.f32 %v832, %v868
  %v901 = vadd.f32 %v833, %v869
  %v902 = vadd.f32 %v834, %v870
  %v903 = vadd.f32 %v835, %v871
  %v904 = vadd.f32 %v836, %v872
  %v905 = vadd.f32 %v837, %v873
  %v906 = vadd.f32 %v838, %v874
  %v907 = vadd.f32 %v839, %v875
  %v908 = vadd.f32 %v840, %v876
  %v909 = vadd.f32 %v841, %v877
  %v910 = vadd.f32 %v842, %v878
  %v911 = vadd.f32 %v843, %v879
  %v912 = vadd.f32 %v844, %v880
  %v913 = vadd.f32 %v845, %v881
  %v914 = vadd.f32 %v846, %v882
  %v915 = vadd.f32 %v847, %v883
  %v916 = vadd.f32 %v848, %v884
  %v917 = vadd.f32 %v849, %v885
  %v918 = vadd.f32 %v850, %v886
  %v919 = vadd.f32 %v851, %v887
  %v920 = vadd.f32 %v852, %v888
  %v921 = vadd.f32 %v853, %v889
  %v922 = vadd.f32 %v854, %v890
  %v923 = vadd.f32 %v855, %v891
  %v924 = vadd.f32 %v856, %v892
  %v925 = vadd.f32 %v857, %v893
  %v926 = vadd.f32 %v858, %v894
  %v927 = vadd.f32 %v859, %v895
  %v928 = vadd.f32 %v860, %v896
  %v929 = vlaneseq
  %v930 = vshrl.u32 %v929, 7
  %v931 = vsub.s32 2, %v930
  %v932 = vrot.slane %v792, %v931
  %v933 = vmul.f32 %v351, %v932
  %v934 = vmul.f32 %v355, %v932
  %v935 = vmul.f32 %v359, %v932
  %v936 = vmul.f32 %v363, %v932
  %v937 = vmul.f32 %v367, %v932
  %v938 = vmul.f32 %v371, %v932
  %v939 = vmul.f32 %v375, %v932
  %v940 = vmul.f32 %v379, %v932
  %v941 = vmul.f32 %v383, %v932
  %v942 = vmul.f32 %v387, %v932
  %v943 = vmul.f32 %v391, %v932
  %v944 = vmul.f32 %v395, %v932
  %v945 = vmul.f32 %v399, %v932
  %v946 = vmul.f32 %v403, %v932
  %v947 = vmul.f32 %v407, %v932
  %v948 = vmul.f32 %v411, %v932
  %v949 = vmul.f32 %v415, %v932
  %v950 = vmul.f32 %v419, %v932
  %v951 = vmul.f32 %v423, %v932
  %v952 = vmul.f32 %v427, %v932
  %v953 = vmul.f32 %v431, %v932
  %v954 = vmul.f32 %v435, %v932
  %v955 = vmul.f32 %v439, %v932
  %v956 = vmul.f32 %v443, %v932
  %v957 = vmul.f32 %v447, %v932
  %v958 = vmul.f32 %v451, %v932
  %v959 = vmul.f32 %v455, %v932
  %v960 = vmul.f32 %v459, %v932
  %v961 = vmul.f32 %v463, %v932
  %v962 = vmul.f32 %v467, %v932
  %v963 = vmul.f32 %v471, %v932
  %v964 = vmul.f32 %v475, %v932
  %v965 = vadd.f32 %v897, %v933
  %v966 = vadd.f32 %v898, %v934
  %v967 = vadd.f32 %v899, %v935
  %v968 = vadd.f32 %v900, %v936
  %v969 = vadd.f32 %v901, %v937
  %v970 = vadd.f32 %v902, %v938
  %v971 = vadd.f32 %v903, %v939
  %v972 = vadd.f32 %v904, %v940
  %v973 = vadd.f32 %v905, %v941
  %v974 = vadd.f32 %v906, %v942
  %v975 = vadd.f32 %v907, %v943
  %v976 = vadd.f32 %v908, %v944
  %v977 = vadd.f32 %v909, %v945
  %v978 = vadd.f32 %v910, %v946
  %v979 = vadd.f32 %v911, %v947
  %v980 = vadd.f32 %v912, %v948
  %v981 = vadd.f32 %v913, %v949
  %v982 = vadd.f32 %v914, %v950
  %v983 = vadd.f32 %v915, %v951
  %v984 = vadd.f32 %v916, %v952
  %v985 = vadd.f32 %v917, %v953
  %v986 = vadd.f32 %v918, %v954
  %v987 = vadd.f32 %v919, %v955
  %v988 = vadd.f32 %v920, %v956
  %v989 = vadd.f32 %v921, %v957
  %v990 = vadd.f32 %v922, %v958
  %v991 = vadd.f32 %v923, %v959
  %v992 = vadd.f32 %v924, %v960
  %v993 = vadd.f32 %v925, %v961
  %v994 = vadd.f32 %v926, %v962
  %v995 = vadd.f32 %v927, %v963
  %v996 = vadd.f32 %v928, %v964
  %v997 = vmax.f32 %v965, 0.0
  %v998 = vmax.f32 %v966, 0.0
  %v999 = vmax.f32 %v967, 0.0
  %v1000 = vmax.f32 %v968, 0.0
  %v1001 = vmax.f32 %v969, 0.0
  %v1002 = vmax.f32 %v970, 0.0
  %v1003 = vmax.f32 %v971, 0.0
  %v1004 = vmax.f32 %v972, 0.0
  %v1005 = vmax.f32 %v973, 0.0
  %v1006 = vmax.f32 %v974, 0.0
  %v1007 = vmax.f32 %v975, 0.0
  %v1008 = vmax.f32 %v976, 0.0
  %v1009 = vmax.f32 %v977, 0.0
  %v1010 = vmax.f32 %v978, 0.0
  %v1011 = vmax.f32 %v979, 0.0
  %v1012 = vmax.f32 %v980, 0.0
  %v1013 = vmax.f32 %v981, 0.0
  %v1014 = vmax.f32 %v982, 0.0
  %v1015 = vmax.f32 %v983, 0.0
  %v1016 = vmax.f32 %v984, 0.0
  %v1017 = vmax.f32 %v985, 0.0
  %v1018 = vmax.f32 %v986, 0.0
  %v1019 = vmax.f32 %v987, 0.0
  %v1020 = vmax.f32 %v988, 0.0
  %v1021 = vmax.f32 %v989, 0.0
  %v1022 = vmax.f32 %v990, 0.0
  %v1023 = vmax.f32 %v991, 0.0
  %v1024 = vmax.f32 %v992, 0.0
  %v1025 = vmax.f32 %v993, 0.0
  %v1026 = vmax.f32 %v994, 0.0
  %v1027 = vmax.f32 %v995, 0.0
  %v1028 = vmax.f32 %v996, 0.0
  %v1029 = vpack.c.bf16 %v998, %v997
  %v1030 = vpack.c.bf16 %v1000, %v999
  %v1031 = vpack.c.bf16 %v1002, %v1001
  %v1032 = vpack.c.bf16 %v1004, %v1003
  %v1033 = vpack.c.bf16 %v1006, %v1005
  %v1034 = vpack.c.bf16 %v1008, %v1007
  %v1035 = vpack.c.bf16 %v1010, %v1009
  %v1036 = vpack.c.bf16 %v1012, %v1011
  %v1037 = vpack.c.bf16 %v1014, %v1013
  %v1038 = vpack.c.bf16 %v1016, %v1015
  %v1039 = vpack.c.bf16 %v1018, %v1017
  %v1040 = vpack.c.bf16 %v1020, %v1019
  %v1041 = vpack.c.bf16 %v1022, %v1021
  %v1042 = vpack.c.bf16 %v1024, %v1023
  %v1043 = vpack.c.bf16 %v1026, %v1025
  %v1044 = vpack.c.bf16 %v1028, %v1027
  %v1061 = vunpack.c.l.b16 %v775
  %v1062 = vunpack.c.h.b16 %v775
  %v1063 = vunpack.c.l.b16 %v776
  %v1064 = vunpack.c.h.b16 %v776
  %v1065 = vunpack.c.l.b16 %v777
  %v1066 = vunpack.c.h.b16 %v777
  %v1067 = vunpack.c.l.b16 %v778
  %v1068 = vunpack.c.h.b16 %v778
  %v1069 = vunpack.c.l.b16 %v779
  %v1070 = vunpack.c.h.b16 %v779
  %v1071 = vunpack.c.l.b16 %v780
  %v1072 = vunpack.c.h.b16 %v780
  %v1073 = vunpack.c.l.b16 %v781
  %v1074 = vunpack.c.h.b16 %v781
  %v1075 = vunpack.c.l.b16 %v782
  %v1076 = vunpack.c.h.b16 %v782
  %v1077 = vunpack.c.l.b16 %v783
  %v1078 = vunpack.c.h.b16 %v783
  %v1079 = vunpack.c.l.b16 %v784
  %v1080 = vunpack.c.h.b16 %v784
  %v1081 = vunpack.c.l.b16 %v785
  %v1082 = vunpack.c.h.b16 %v785
  %v1083 = vunpack.c.l.b16 %v786
  %v1084 = vunpack.c.h.b16 %v786
  %v1085 = vunpack.c.l.b16 %v787
  %v1086 = vunpack.c.h.b16 %v787
  %v1087 = vunpack.c.l.b16 %v788
  %v1088 = vunpack.c.h.b16 %v788
  %v1089 = vunpack.c.l.b16 %v789
  %v1090 = vunpack.c.h.b16 %v789
  %v1091 = vunpack.c.l.b16 %v790
  %v1092 = vunpack.c.h.b16 %v790
  %v1093 = vpack.c.b16 %v1063, %v1061
  %v1094 = vpack.c.b16 %v1064, %v1062
  %v1095 = vpack.c.b16 %v1067, %v1065
  %v1096 = vpack.c.b16 %v1068, %v1066
  %v1097 = vpack.c.b16 %v1071, %v1069
  %v1098 = vpack.c.b16 %v1072, %v1070
  %v1099 = vpack.c.b16 %v1075, %v1073
  %v1100 = vpack.c.b16 %v1076, %v1074
  %v1101 = vpack.c.b16 %v1079, %v1077
  %v1102 = vpack.c.b16 %v1080, %v1078
  %v1103 = vpack.c.b16 %v1083, %v1081
  %v1104 = vpack.c.b16 %v1084, %v1082
  %v1105 = vpack.c.b16 %v1087, %v1085
  %v1106 = vpack.c.b16 %v1088, %v1086
  %v1107 = vpack.c.b16 %v1091, %v1089
  %v1108 = vpack.c.b16 %v1092, %v1090
  %1125 = vmatprep.subr.bf16.mxu0 0
  %1126 = vmatpush1.bf16.msra.mxu0 %v1036
  %1127 = vmatprep.subr.bf16.mxu0 0
  %1128 = vmatpush1.bf16.msra.mxu0 %v1035
  %1129 = vmatprep.subr.bf16.mxu0 0
  %1130 = vmatpush1.bf16.msra.mxu0 %v1034
  %1131 = vmatprep.subr.bf16.mxu0 0
  %1132 = vmatpush1.bf16.msra.mxu0 %v1033
  %1133 = vmatprep.subr.bf16.mxu0 0
  %1134 = vmatpush1.bf16.msra.mxu0 %v1032
  %1135 = vmatprep.subr.bf16.mxu0 0
  %1136 = vmatpush1.bf16.msra.mxu0 %v1031
  %1137 = vmatprep.subr.bf16.mxu0 0
  %1138 = vmatpush1.bf16.msra.mxu0 %v1030
  %1139 = vmatprep.subr.bf16.mxu0 0
  %1140 = vmatpush1.bf16.msra.mxu0 %v1029
  %1141 = vmatprep.subr.bf16.mxu0 0
  %1142 = vmatpush2.bf16.msra.mxu0 %v1044
  %1143 = vmatprep.subr.bf16.mxu0 0
  %1144 = vmatpush2.bf16.msra.mxu0 %v1043
  %1145 = vmatprep.subr.bf16.mxu0 0
  %1146 = vmatpush2.bf16.msra.mxu0 %v1042
  %1147 = vmatprep.subr.bf16.mxu0 0
  %1148 = vmatpush2.bf16.msra.mxu0 %v1041
  %1149 = vmatprep.subr.bf16.mxu0 0
  %1150 = vmatpush2.bf16.msra.mxu0 %v1040
  %1151 = vmatprep.subr.bf16.mxu0 0
  %1152 = vmatpush2.bf16.msra.mxu0 %v1039
  %1153 = vmatprep.subr.bf16.mxu0 0
  %1154 = vmatpush2.bf16.msra.mxu0 %v1038
  %1155 = vmatprep.subr.bf16.mxu0 0
  %1156 = vmatpush2.bf16.msra.mxu0 %v1037
  %1157 = vmatprep.mubr.bf16.mxu0 %v1094
  %1158 = vmatmul.mubr.bf16.gmra.mxu0 %v1093
  %v1159 = vpop.f32.mrf.mxu0
  %v1160 = vadd.f32 %v688, %v1159
  %v1161 = vpop.f32.mrf.mxu0
  %v1162 = vpop.f32.mrf.mxu0
  %v1163 = vadd.f32 %v693, %v1162
  %v1164 = vpop.f32.mrf.mxu0
  %1165 = vmatprep.mubr.bf16.mxu0 %v1096
  %1166 = vmatmul.mubr.bf16.gmra.mxu0 %v1095
  %v1167 = vpop.f32.mrf.mxu0
  %v1168 = vadd.f32 %v698, %v1167
  %v1169 = vpop.f32.mrf.mxu0
  %v1170 = vpop.f32.mrf.mxu0
  %v1171 = vadd.f32 %v703, %v1170
  %v1172 = vpop.f32.mrf.mxu0
  %1173 = vmatprep.mubr.bf16.mxu0 %v1098
  %1174 = vmatmul.mubr.bf16.gmra.mxu0 %v1097
  %v1175 = vpop.f32.mrf.mxu0
  %v1176 = vadd.f32 %v708, %v1175
  %v1177 = vpop.f32.mrf.mxu0
  %v1178 = vpop.f32.mrf.mxu0
  %v1179 = vadd.f32 %v713, %v1178
  %v1180 = vpop.f32.mrf.mxu0
  %1181 = vmatprep.mubr.bf16.mxu0 %v1100
  %1182 = vmatmul.mubr.bf16.gmra.mxu0 %v1099
  %v1183 = vpop.f32.mrf.mxu0
  %v1184 = vadd.f32 %v718, %v1183
  %v1185 = vpop.f32.mrf.mxu0
  %v1186 = vpop.f32.mrf.mxu0
  %v1187 = vadd.f32 %v723, %v1186
  %v1188 = vpop.f32.mrf.mxu0
  %1189 = vmatprep.mubr.bf16.mxu0 %v1102
  %1190 = vmatmul.mubr.bf16.gmra.mxu0 %v1101
  %v1191 = vpop.f32.mrf.mxu0
  %v1192 = vadd.f32 %v728, %v1191
  %v1193 = vpop.f32.mrf.mxu0
  %v1194 = vpop.f32.mrf.mxu0
  %v1195 = vadd.f32 %v733, %v1194
  %v1196 = vpop.f32.mrf.mxu0
  %1197 = vmatprep.mubr.bf16.mxu0 %v1104
  %1198 = vmatmul.mubr.bf16.gmra.mxu0 %v1103
  %v1199 = vpop.f32.mrf.mxu0
  %v1200 = vadd.f32 %v738, %v1199
  %v1201 = vpop.f32.mrf.mxu0
  %v1202 = vpop.f32.mrf.mxu0
  %v1203 = vadd.f32 %v743, %v1202
  %v1204 = vpop.f32.mrf.mxu0
  %1205 = vmatprep.mubr.bf16.mxu0 %v1106
  %1206 = vmatmul.mubr.bf16.gmra.mxu0 %v1105
  %v1207 = vpop.f32.mrf.mxu0
  %v1208 = vadd.f32 %v748, %v1207
  %v1209 = vpop.f32.mrf.mxu0
  %v1210 = vpop.f32.mrf.mxu0
  %v1211 = vadd.f32 %v753, %v1210
  %v1212 = vpop.f32.mrf.mxu0
  %1213 = vmatprep.mubr.bf16.mxu0 %v1108
  %1214 = vmatmul.mubr.bf16.gmra.mxu0 %v1107
  %v1215 = vpop.f32.mrf.mxu0
  %v1216 = vadd.f32 %v758, %v1215
  %v1217 = vpop.f32.mrf.mxu0
  %v1218 = vpop.f32.mrf.mxu0
  %v1219 = vadd.f32 %v763, %v1218
  %v1220 = vpop.f32.mrf.mxu0
  %1221 = vdwg.mxu0
  %v1222 = vmax.f32 %v1160, 0.0
  %v1223 = vmax.f32 %v1163, 0.0
  %v1224 = vmax.f32 %v1168, 0.0
  %v1225 = vmax.f32 %v1171, 0.0
  %v1226 = vmax.f32 %v1176, 0.0
  %v1227 = vmax.f32 %v1179, 0.0
  %v1228 = vmax.f32 %v1184, 0.0
  %v1229 = vmax.f32 %v1187, 0.0
  %v1230 = vmax.f32 %v1192, 0.0
  %v1231 = vmax.f32 %v1195, 0.0
  %v1232 = vmax.f32 %v1200, 0.0
  %v1233 = vmax.f32 %v1203, 0.0
  %v1234 = vmax.f32 %v1208, 0.0
  %v1235 = vmax.f32 %v1211, 0.0
  %v1236 = vmax.f32 %v1216, 0.0
  %v1237 = vmax.f32 %v1219, 0.0
  %v1238 = vpack.c.bf16 %v1223, %v1222
  %v1239 = vpack.c.bf16 %v1225, %v1224
  %v1240 = vpack.c.bf16 %v1227, %v1226
  %v1241 = vpack.c.bf16 %v1229, %v1228
  %v1242 = vpack.c.bf16 %v1231, %v1230
  %v1243 = vpack.c.bf16 %v1233, %v1232
  %v1244 = vpack.c.bf16 %v1235, %v1234
  %v1245 = vpack.c.bf16 %v1237, %v1236
  %1246 = vmatprep.subr.bf16.mxu0 0
  %1247 = vmatpush1.bf16.msra.mxu0 %v1245
  %1248 = vmatprep.subr.bf16.mxu0 0
  %1249 = vmatpush1.bf16.msra.mxu0 %v1244
  %1250 = vmatprep.subr.bf16.mxu0 0
  %1251 = vmatpush1.bf16.msra.mxu0 %v1243
  %1252 = vmatprep.subr.bf16.mxu0 0
  %1253 = vmatpush1.bf16.msra.mxu0 %v1242
  %1254 = vmatprep.subr.bf16.mxu0 0
  %1255 = vmatpush1.bf16.msra.mxu0 %v1241
  %1256 = vmatprep.subr.bf16.mxu0 0
  %1257 = vmatpush1.bf16.msra.mxu0 %v1240
  %1258 = vmatprep.subr.bf16.mxu0 0
  %1259 = vmatpush1.bf16.msra.mxu0 %v1239
  %1260 = vmatprep.subr.bf16.mxu0 0
  %1261 = vmatpush1.bf16.msra.mxu0 %v1238
  %1262 = vmatprep.subr.bf16.mxu0 0
  %1263 = vmatpush2.bf16.msra.mxu0 0
  %1264 = vmatprep.subr.bf16.mxu0 0
  %1265 = vmatpush2.bf16.msra.mxu0 0
  %1266 = vmatprep.subr.bf16.mxu0 0
  %1267 = vmatpush2.bf16.msra.mxu0 0
  %1268 = vmatprep.subr.bf16.mxu0 0
  %1269 = vmatpush2.bf16.msra.mxu0 0
  %1270 = vmatprep.subr.bf16.mxu0 0
  %1271 = vmatpush2.bf16.msra.mxu0 0
  %1272 = vmatprep.subr.bf16.mxu0 0
  %1273 = vmatpush2.bf16.msra.mxu0 0
  %1274 = vmatprep.subr.bf16.mxu0 0
  %1275 = vmatpush2.bf16.msra.mxu0 0
  %1276 = vmatprep.subr.bf16.mxu0 0
  %1277 = vmatpush2.bf16.msra.mxu0 0
  %1278 = vmatprep.mubr.bf16.mxu0 0
  %1279 = vmatmul.mubr.bf16.gmra.mxu0 %v791
  %v1280 = vpop.f32.mrf.mxu0
  %v1281 = vadd.f32 %v774, %v1280
  %v1282 = vpop.f32.mrf.mxu0
  %v1283 = vpop.f32.mrf.mxu0
  %v1284 = vpop.f32.mrf.mxu0
  %1285 = vdwg.mxu0
  %v1286 = vtanh.pop %v1281
  %1287 = vst [vmem:[%s7] sm:$0x1] %v1286
  // Predicated region
  $region30: #{actor_forward.1} parent=0 // pred_check
    _
  $region31: #{actor_forward.1} parent=0 // pred_check_branch
    %1289 = sbr.rel (0) target = $region33
  $region32: #{actor_forward.1} parent=0 // pred_region
    _
  $region33: #{actor_forward.1} parent=0 // pred_fallthru
    _
  // Predicated region
  $region34: #{actor_forward.1} parent=0 // pred_check
    _
  $region35: #{actor_forward.1} parent=0 // pred_check_branch
    %1291 = sbr.rel (0) target = $region37
  $region36: #{actor_forward.1} parent=0 // pred_region
    _
  $region37: #{actor_forward.1} parent=0 // pred_fallthru
    _

</llo_original>
